<compile_context>
chip_gen: v7x
topology: tpu7x:2x2x1
jax: 0.10.0
libtpu: 0.0.40
codegen_flags: <defaults>
</compile_context>

<pallas_src>
import functools

import numpy as np
import jax
import jax.numpy as jnp
from jax import lax
from jax.experimental import pallas as pl
from jax.experimental.pallas import tpu as pltpu


# ----------------------------------------------------------------------------
# Parameter / buffer setup (mirrors PyTorch __init__)
# ----------------------------------------------------------------------------
def make_positional_encoding_table(d_model, max_len=5000, dtype=jnp.float32):
    position = np.arange(max_len, dtype=np.float32)[:, None]              # (max_len, 1)
    div_term = np.exp(np.arange(0, d_model, 2, dtype=np.float32)
                      * -(np.log(10000.0) / d_model))                     # (d_model/2,)
    pe = np.zeros((max_len, 1, d_model), dtype=np.float32)
    pe[:, 0, 0::2] = np.sin(position * div_term)
    pe[:, 0, 1::2] = np.cos(position * div_term)
    return jnp.asarray(pe, dtype)                                          # (max_len, 1, d_model)


# ----------------------------------------------------------------------------
# Pallas kernel: out = dropout(x + pe) for one seq tile
# ----------------------------------------------------------------------------
def _pe_dropout_kernel(seed_ref, x_ref, pe_ref, o_ref, *, p, training,
                       block_elems, batch, d_model):
    # x_ref : (ts, B, D) VMEM tile
    # pe_ref: (ts, D)    VMEM tile, broadcast over batch (sublane broadcast)
    y = x_ref[...] + pe_ref[...][:, None, :]

    if training and p >= 1.0:
        y = jnp.zeros_like(y)
    elif training and p > 0.0:
        # Portable counter-based RNG: hash the global linear element index with
        # the seed (splitmix32-style finalizer).  Pure VPU integer ops -> lowers
        # on Mosaic and in interpret mode; mask is independent of tiling.
        shape = x_ref.shape
        i0 = lax.broadcasted_iota(jnp.uint32, shape, 0)
        i1 = lax.broadcasted_iota(jnp.uint32, shape, 1)
        i2 = lax.broadcasted_iota(jnp.uint32, shape, 2)
        lin = (i0 * jnp.uint32(batch) + i1) * jnp.uint32(d_model) + i2
        base = jnp.uint32(block_elems) * pl.program_id(0).astype(jnp.uint32)
        seed_u = seed_ref[0].astype(jnp.uint32)

        z = (base + lin) ^ (seed_u * jnp.uint32(0x9E3779B9))
        z = (z ^ (z >> jnp.uint32(16))) * jnp.uint32(0x85EBCA6B)
        z = (z ^ (z >> jnp.uint32(13))) * jnp.uint32(0xC2B2AE35)
        z = z ^ (z >> jnp.uint32(16))

        threshold = jnp.uint32(min(int(round(p * 2.0**32)), 2**32 - 1))
        keep = z >= threshold                              # P(keep) ~= 1 - p
        scale = jnp.asarray(1.0 / (1.0 - p), dtype=y.dtype)
        y = jnp.where(keep, y * scale, jnp.zeros_like(y))

    o_ref[...] = y.astype(o_ref.dtype)


# ----------------------------------------------------------------------------
# Tile-size selection (VMEM-aware, pipelining-friendly)
# ----------------------------------------------------------------------------
def _choose_seq_block(S, B, D, itemsize, target_tile_bytes=4 << 20):
    """~4 MiB of x per tile; multiple of 8 rows so pe's (ts, D) tile is
    sublane-aligned.  Double-buffered working set stays < ~20 MiB (v7x-safe)."""
    row_bytes = max(1, B * D * itemsize)
    ts = target_tile_bytes // row_bytes
    if ts >= S:
        return S
    ts = max(8, (ts // 8) * 8)
    return int(min(ts, S))


# ----------------------------------------------------------------------------
# Wrapper (forward pass)
# ----------------------------------------------------------------------------
def positional_encoding_forward(x, pe, *, p=0.1, training=False, seed=0,
                                seq_block=None):
    """Pallas equivalent of PositionalEncoding.forward.

    x : (S, B, D)    pe : (max_len, 1, D)   ->   (S, B, D)
    """
    S, B, D = x.shape
    pe2d = pe[:S, 0, :].astype(x.dtype)            # (S, D), like pe[:x.size(0)]

    if seq_block is None:
        seq_block = _choose_seq_block(S, B, D, x.dtype.itemsize)
    seq_block = int(min(seq_block, S))
    grid = (pl.cdiv(S, seq_block),)                # last tile padded by Pallas

    seed_arr = jnp.array([seed], dtype=jnp.int32)
    kernel = functools.partial(
        _pe_dropout_kernel, p=float(p), training=bool(training),
        block_elems=seq_block * B * D, batch=B, d_model=D)

    return pl.pallas_call(
        kernel,
        out_shape=jax.ShapeDtypeStruct((S, B, D), x.dtype),
        grid_spec=pltpu.PrefetchScalarGridSpec(
            num_scalar_prefetch=1,                 # seed lands in SMEM
            grid=grid,
            in_specs=[
                pl.BlockSpec((seq_block, B, D), lambda i, seed: (i, 0, 0)),
                pl.BlockSpec((seq_block, D),    lambda i, seed: (i, 0)),
            ],
            out_specs=pl.BlockSpec((seq_block, B, D), lambda i, seed: (i, 0, 0)),
        ),
        compiler_params=pltpu.CompilerParams(
            # seq tiles are fully independent -> megacore-shardable on v7x
            dimension_semantics=("parallel",),
            # above v5e's 16 MiB scoped default, below v7x's 64 MiB physical
            vmem_limit_bytes=48 * 1024 * 1024,
        ),
    )(seed_arr, x, pe2d)


# ----------------------------------------------------------------------------
# Demo / self-check
# ----------------------------------------------------------------------------
if __name__ == "__main__":
    d_model = 32
    max_len = 64
    seq_len = 8
    batch = 2
    p_drop = 0.1

    key = jax.random.PRNGKey(0)
    x = jax.random.normal(key, (seq_len, batch, d_model), dtype=jnp.float32)
    pe = make_positional_encoding_table(d_model, max_len=max_len)

    # Eval mode (dropout is identity) — must match the reference exactly.
    out_eval = jax.block_until_ready(
        positional_encoding_forward(x, pe, p=p_drop, training=False))
    ref = np.asarray(x) + np.asarray(pe[:seq_len])   # (S,1,D) broadcasts over batch
    np.testing.assert_allclose(np.asarray(out_eval), ref, rtol=1e-6, atol=1e-6)

    # Training mode (inverted dropout): every element is either 0 or ref/(1-p).
    out_train = jax.block_until_ready(
        positional_encoding_forward(x, pe, p=p_drop, training=True, seed=123))
    ot = np.asarray(out_train)
    assert ot.shape == (seq_len, batch, d_model)
    scaled = ref / (1.0 - p_drop)
    is_zero = np.isclose(ot, 0.0, atol=1e-12)
    is_kept = np.isclose(ot, scaled, rtol=1e-5, atol=1e-6)
    assert np.all(is_zero | is_kept)
    drop_frac = float(is_zero.mean())
    assert 0.0 <= drop_frac <= 0.6                   # loose sanity check around p=0.1

    print("KERNEL_OK")
</pallas_src>

<mosaic_0001>
module attributes {stable_mosaic.version = 11 : i64} {
  func.func @_pe_dropout_kernel(%arg0: i32, %arg1: memref<1xi32, #tpu.memory_space<smem>>, %arg2: memref<8x2x32xf32, #tpu.memory_space<vmem>>, %arg3: memref<8x32xf32, #tpu.memory_space<vmem>>, %arg4: memref<8x2x32xf32, #tpu.memory_space<vmem>>) attributes {dimension_semantics = [#tpu.dimension_semantics<parallel>], iteration_bounds = array<i64: 1>, scalar_prefetch = 1 : i64, scratch_operands = 0 : i64, tpu.core_type = #tpu.core_type<tc>, window_params = [{transform_indices = @transform_0, window_bounds = array<i64: 8, 2, 32>}, {transform_indices = @transform_1, window_bounds = array<i64: 8, 32>}, {transform_indices = @transform_2, window_bounds = array<i64: 8, 2, 32>}]} {
    %c0 = arith.constant 0 : index
    %c0_0 = arith.constant 0 : index
    %c0_1 = arith.constant 0 : index
    %0 = vector.load %arg2[%c0, %c0_0, %c0_1] : memref<8x2x32xf32, #tpu.memory_space<vmem>>, vector<8x2x32xf32>
    %c0_2 = arith.constant 0 : index
    %c0_3 = arith.constant 0 : index
    %1 = vector.load %arg3[%c0_2, %c0_3] : memref<8x32xf32, #tpu.memory_space<vmem>>, vector<8x32xf32>
    %2 = vector.shape_cast %1 : vector<8x32xf32> to vector<8x1x32xf32>
    %3 = vector.broadcast %2 : vector<8x1x32xf32> to vector<8x2x32xf32>
    %4 = arith.addf %0, %3 : vector<8x2x32xf32>
    %c0_4 = arith.constant 0 : index
    %c0_5 = arith.constant 0 : index
    %c0_6 = arith.constant 0 : index
    %5 = vector.load %arg4[%c0_4, %c0_5, %c0_6] : memref<8x2x32xf32, #tpu.memory_space<vmem>>, vector<8x2x32xf32>
    tpu.vector_store %arg4[%c0_4, %c0_5, %c0_6], %4 {strides = array<i32>} : memref<8x2x32xf32, #tpu.memory_space<vmem>>, vector<8x2x32xf32>,
    return
  }
  func.func @transform_0(%arg0: i32, %arg1: memref<1xi32, #tpu.memory_space<smem>>) -> (i32, i32, i32) {
    %c0_i32 = arith.constant 0 : i32
    %c0_i32_0 = arith.constant 0 : i32
    %c0_i32_1 = arith.constant 0 : i32
    return %arg0, %c0_i32, %c0_i32_0 : i32, i32, i32
  }
  func.func @transform_1(%arg0: i32, %arg1: memref<1xi32, #tpu.memory_space<smem>>) -> (i32, i32) {
    %c0_i32 = arith.constant 0 : i32
    %c0_i32_0 = arith.constant 0 : i32
    return %arg0, %c0_i32 : i32, i32
  }
  func.func @transform_2(%arg0: i32, %arg1: memref<1xi32, #tpu.memory_space<smem>>) -> (i32, i32, i32) {
    %c0_i32 = arith.constant 0 : i32
    %c0_i32_0 = arith.constant 0 : i32
    %c0_i32_1 = arith.constant 0 : i32
    return %arg0, %c0_i32, %c0_i32_0 : i32, i32, i32
  }
}

</mosaic_0001>

<llo_original>
// kernel: tpu_custom_call.1
$region0: #{tpu_custom_call.1}
  #allocation0 [shape = 'u32[]', space=smem, size = 0x4, offset = 0x4, fixed_abs, tag = 'smem constant byte address 0x4 - core index']
  #allocation1 [shape = 'u32[144,128]{1,0:T(1,128)}', space=vmem, size = 0x12000, scoped, tag = 'internal scratch']
  #allocation2 [shape = 's32[1]{0}', space=sflag, size = 0x4, scoped, tag = 'scoped memory for tpu_custom_call.1']
  #allocation3 [shape = 's32[1]{0:T(128)S(6)}', space=smem, size = 0x200, scoped, tag = 'prefetched SMEM operand 0']
  %s0 = inlined_call_operand.<no memory space> [shape: s32[1], index: 0, kind: input, shape index: {}]
  %s1 = inlined_call_operand.hbm [shape: f32[8,2,32], index: 1, kind: input, shape index: {}]
  %s2 = inlined_call_operand.hbm [shape: f32[8,32], index: 2, kind: input, shape index: {}]
  %s3 = inlined_call_operand.hbm [shape: f32[8,2,32], index: 3, kind: output, shape index: {}]
  %s4 = sld [smem:[#allocation0]]
  $region26: #{tpu_custom_call.1} parent=0
    _
  %s6 = ssub.s32 1, %s4
  %s7 = scalar_select 0, %s6, %s4
  %8 = sst [smem:[#allocation3]] %s0
  $region1: #{tpu_custom_call.1} parent=0
    #allocation4 [shape = 'u8[8192]{0}', space=vmem, size = 0x2000, scoped, tag = 'input window, operand 1, single buffered']
    #allocation5 [shape = 's32[1]{0}', space=sflag, size = 0x4, scoped, tag = 'scoped memory for tpu_custom_call.1']
    #allocation6 [shape = 's32[1]{0}', space=sflag, size = 0x4, scoped, tag = 'scoped memory for tpu_custom_call.1']
    #allocation7 [shape = 'u8[4096]{0}', space=vmem, size = 0x1000, scoped, tag = 'input window, operand 2, single buffered']
    #allocation8 [shape = 's32[1]{0}', space=sflag, size = 0x4, scoped, tag = 'scoped memory for tpu_custom_call.1']
    #allocation9 [shape = 'u8[8192]{0}', space=vmem, size = 0x2000, scoped, tag = 'output window, operand 0, single buffered']
    %9 = vsyncpa [#allocation5], 0
    %10 = vsyncpa [#allocation8], 0
    %11 = vsyncpa [#allocation6], 0
    // Predicated region
    $region2: #{tpu_custom_call.1} parent=1 // pred_check
      _
    $region3: #{tpu_custom_call.1} parent=1 // pred_check_branch
      %13 = sbr.rel (0) target = $region5
    $region4: #{tpu_custom_call.1} parent=1 // pred_region
      %s15 = ssub.s32 256, 256
      %16 = vsyncadd [#allocation5], %s15
      %s17 = sshll.u32 [#allocation4], 4
      %s18 = int_to_ptr.vmem [resolvable:$true] %s17
      %23 = dma.hbm_to_vmem [thread:$0]  %s1, 256, %s18, [#allocation5], 32, 32, 2
    $region5: #{tpu_custom_call.1} parent=1 // pred_fallthru
      _
    // Predicated region
    $region6: #{tpu_custom_call.1} parent=1 // pred_check
      _
    $region7: #{tpu_custom_call.1} parent=1 // pred_check_branch
      %25 = sbr.rel (0) target = $region9
    $region8: #{tpu_custom_call.1} parent=1 // pred_region
      %s27 = ssub.s32 128, 128
      %28 = vsyncadd [#allocation8], %s27
      %s30 = sshll.u32 [#allocation7], 4
      %s31 = int_to_ptr.vmem [resolvable:$true] %s30
      %33 = dma.hbm_to_vmem [thread:$0]  %s2, 128, %s31, [#allocation8]
    $region9: #{tpu_custom_call.1} parent=1 // pred_fallthru
      _
    // Predicated region
    $region10: #{tpu_custom_call.1} parent=1 // pred_check
      _
    $region11: #{tpu_custom_call.1} parent=1 // pred_check_branch
      %35 = sbr.rel (0) target = $region13
    $region12: #{tpu_custom_call.1} parent=1 // pred_region
      %36 = dma.done [#allocation5], 256
    $region13: #{tpu_custom_call.1} parent=1 // pred_fallthru
      _
    // Predicated region
    $region14: #{tpu_custom_call.1} parent=1 // pred_check
      _
    $region15: #{tpu_custom_call.1} parent=1 // pred_check_branch
      %38 = sbr.rel (0) target = $region17
    $region16: #{tpu_custom_call.1} parent=1 // pred_region
      %39 = dma.done [#allocation8], 128
    $region17: #{tpu_custom_call.1} parent=1 // pred_fallthru
      _
    %v40 = vld [vmem:[#allocation4] sm:$0x3]
    %v41 = vld [vmem:[#allocation4 + $0x2] sm:$0x3]
    %v42 = vld [vmem:[#allocation4 + $0x4] sm:$0x3]
    %v43 = vld [vmem:[#allocation4 + $0x6] sm:$0x3]
    %v44 = vld [vmem:[#allocation4 + $0x8] sm:$0x3]
    %v45 = vld [vmem:[#allocation4 + $0xa] sm:$0x3]
    %v46 = vld [vmem:[#allocation4 + $0xc] sm:$0x3]
    %v47 = vld [vmem:[#allocation4 + $0xe] sm:$0x3]
    %v48 = vld [vmem:[#allocation7] sm:$0xff]
    %v50 = vcombine.high %v48, %v48
    %v52 = vunpack.c.l.s4 1966171168
    %v53 = vunpack.c.0.s8 %v52
    %v54 = vlaneseq
    %v55 = vshrl.u32 %v54, 7
    %v56 = vsub.s32 %v53, %v55
    %v57 = vrot.slane %v48, %v56
    %v59 = vunpack.c.l.s4 1966171168
    %v60 = vunpack.c.0.s8 %v59
    %v61 = vlaneseq
    %v62 = vshrl.u32 %v61, 7
    %v63 = vsub.s32 %v60, %v62
    %v64 = vrot.slane %v50, %v63
    %v65 = vcombine.high %v57, %v57
    %v66 = vcombine.high %v64, %v64
    %v68 = vunpack.c.l.s4 1966171168
    %v69 = vunpack.c.0.s8 %v68
    %v70 = vlaneseq
    %v71 = vshrl.u32 %v70, 7
    %v72 = vsub.s32 %v69, %v71
    %v73 = vrot.slane %v57, %v72
    %v75 = vunpack.c.l.s4 1966171168
    %v76 = vunpack.c.0.s8 %v75
    %v77 = vlaneseq
    %v78 = vshrl.u32 %v77, 7
    %v79 = vsub.s32 %v76, %v78
    %v80 = vrot.slane %v64, %v79
    %v82 = vunpack.c.l.s4 1966171168
    %v83 = vunpack.c.0.s8 %v82
    %v84 = vlaneseq
    %v85 = vshrl.u32 %v84, 7
    %v86 = vsub.s32 %v83, %v85
    %v87 = vrot.slane %v65, %v86
    %v89 = vunpack.c.l.s4 1966171168
    %v90 = vunpack.c.0.s8 %v89
    %v91 = vlaneseq
    %v92 = vshrl.u32 %v91, 7
    %v93 = vsub.s32 %v90, %v92
    %v94 = vrot.slane %v66, %v93
    %v95 = vcombine.high %v73, %v73
    %v96 = vcombine.high %v80, %v80
    %v97 = vcombine.high %v87, %v87
    %v98 = vcombine.high %v94, %v94
    %v99 = vlaneseq
    %v100 = vshrl.u32 %v99, 7
    %v101 = vsub.s32 0, %v100
    %v102 = vrot.slane %v73, %v101
    %v103 = vlaneseq
    %v104 = vshrl.u32 %v103, 7
    %v105 = vsub.s32 0, %v104
    %v106 = vrot.slane %v87, %v105
    %v107 = vlaneseq
    %v108 = vshrl.u32 %v107, 7
    %v109 = vsub.s32 0, %v108
    %v110 = vrot.slane %v95, %v109
    %v111 = vlaneseq
    %v112 = vshrl.u32 %v111, 7
    %v113 = vsub.s32 0, %v112
    %v114 = vrot.slane %v97, %v113
    %v115 = vlaneseq
    %v116 = vshrl.u32 %v115, 7
    %v117 = vsub.s32 0, %v116
    %v118 = vrot.slane %v80, %v117
    %v119 = vlaneseq
    %v120 = vshrl.u32 %v119, 7
    %v121 = vsub.s32 0, %v120
    %v122 = vrot.slane %v94, %v121
    %v123 = vlaneseq
    %v124 = vshrl.u32 %v123, 7
    %v125 = vsub.s32 0, %v124
    %v126 = vrot.slane %v96, %v125
    %v127 = vlaneseq
    %v128 = vshrl.u32 %v127, 7
    %v129 = vsub.s32 0, %v128
    %v130 = vrot.slane %v98, %v129
    %v139 = vadd.f32 %v40, %v102
    %v140 = vadd.f32 %v41, %v106
    %v141 = vadd.f32 %v42, %v110
    %v142 = vadd.f32 %v43, %v114
    %v143 = vadd.f32 %v44, %v118
    %v144 = vadd.f32 %v45, %v122
    %v145 = vadd.f32 %v46, %v126
    %v146 = vadd.f32 %v47, %v130
    %vm147 = vcmask 254976
    %148 = vst.msk [vmem:[#allocation9] sm:$0x3] %vm147, %v139
    %149 = vst.msk [vmem:[#allocation9 + $0x2] sm:$0x3] %vm147, %v140
    %150 = vst.msk [vmem:[#allocation9 + $0x4] sm:$0x3] %vm147, %v141
    %151 = vst.msk [vmem:[#allocation9 + $0x6] sm:$0x3] %vm147, %v142
    %152 = vst.msk [vmem:[#allocation9 + $0x8] sm:$0x3] %vm147, %v143
    %153 = vst.msk [vmem:[#allocation9 + $0xa] sm:$0x3] %vm147, %v144
    %154 = vst.msk [vmem:[#allocation9 + $0xc] sm:$0x3] %vm147, %v145
    %155 = vst.msk [vmem:[#allocation9 + $0xe] sm:$0x3] %vm147, %v146
    // Predicated region
    $region18: #{tpu_custom_call.1} parent=1 // pred_check
      _
    $region19: #{tpu_custom_call.1} parent=1 // pred_check_branch
      %157 = sbr.rel (0) target = $region21
    $region20: #{tpu_custom_call.1} parent=1 // pred_region
      %s159 = ssub.s32 256, 256
      %160 = vsyncadd [#allocation6], %s159
      %s161 = sshll.u32 [#allocation9], 4
      %s162 = int_to_ptr.vmem [resolvable:$true] %s161
      %167 = dma.vmem_to_hbm [thread:$0]  %s162, 256, %s3, [#allocation6], 32, 32, 2
    $region21: #{tpu_custom_call.1} parent=1 // pred_fallthru
      _
    // Predicated region
    $region22: #{tpu_custom_call.1} parent=1 // pred_check
      _
    $region23: #{tpu_custom_call.1} parent=1 // pred_check_branch
      %169 = sbr.rel (0) target = $region25
    $region24: #{tpu_custom_call.1} parent=1 // pred_region
      %170 = dma.done [#allocation6], 256
    $region25: #{tpu_custom_call.1} parent=1 // pred_fallthru
      _
    %171 = vsyncpa [#allocation5], 1
    %172 = vsyncpa [#allocation8], 1
    %173 = vsyncpa [#allocation6], 1

</llo_original>
